<compile_context>
chip_gen: v7x
topology: tpu7x:2x2x1
jax: 0.10.0
libtpu: 0.0.40
codegen_flags: <defaults>
</compile_context>

<pallas_src>
import functools

import jax
import jax.numpy as jnp
from jax.experimental import pallas as pl
from jax.experimental.pallas import tpu as pltpu


def sgns_loss_kernel(iv_ref, cat_ref, out_ref, *, context_size):
    """Per-batch-tile SGNS loss.

    iv_ref  : (TB, E)        gathered input-word vectors
    cat_ref : (TB, CT, E)    gathered [positive | negative] context vectors,
                             CT = C * (1 + n_negs)
    out_ref : (TB, 1)        per-sample -(oloss + nloss)
    """
    iv = iv_ref[...].astype(jnp.float32)        # (TB, E)
    cat = cat_ref[...].astype(jnp.float32)      # (TB, CT, E)
    tb, ct, _ = cat.shape

    # Batched mat-vec on the MXU: (TB,1,E) x (TB,CT,E) contracting E.
    scores = jnp.einsum(
        "bqe,bce->bqc", iv[:, None, :], cat,
        preferred_element_type=jnp.float32)[:, 0, :]            # (TB, CT)

    # First C columns are positive-context scores; the rest are negatives
    # (PyTorch negates nvectors before the bmm -> flip the sign there).
    col = jax.lax.broadcasted_iota(jnp.int32, (tb, ct), 1)
    signed = jnp.where(col < context_size, scores, -scores)

    # Numerically stable log(sigmoid(x)) = min(x, 0) - log(1 + exp(-|x|)).
    logsig = jnp.minimum(signed, 0.0) - jnp.log(1.0 + jnp.exp(-jnp.abs(signed)))

    # oloss = mean_C logsig(o);  nloss = sum_{C*N} logsig(n) / C
    #   => per-sample loss = -(sum over all CT columns) / C.
    out_ref[...] = -(jnp.sum(logsig, axis=1, keepdims=True)
                     / jnp.float32(context_size))


def _pick_batch_tile(batch, ct, embed, itemsize,
                     vmem_budget_bytes=12 * 1024 * 1024):
    """Largest batch tile whose double-buffered tiles fit the VMEM budget."""
    # One batch row's worth of kernel input/output tiles, x2 (double buffer).
    row_bytes = (ct * embed + embed + 1) * itemsize * 2
    max_tb = max(1, vmem_budget_bytes // row_bytes)
    if batch <= max_tb:
        return batch                                   # whole batch, 1 step
    best = 1
    for tb in range(1, min(batch, max_tb) + 1):        # prefer multiples of 8
        if batch % tb == 0 and tb % 8 == 0:
            best = tb
    if best == 1:
        for tb in range(min(batch, max_tb), 0, -1):    # fallback: any divisor
            if batch % tb == 0:
                return tb
    return best


def sgns_forward(iword, owords, emb_i, emb_o, neg_weights, n_negs, key):
    """Full SGNS forward.  Returns the scalar loss (f32)."""
    batch_size = iword.shape[0]
    context_size = owords.shape[1]
    embed_dim = emb_i.shape[1]
    ct = context_size * (1 + n_negs)

    # Negative sampling ~ t.multinomial(weights, B*C*n_negs, replacement=True)
    nwords = jax.random.categorical(
        key, jnp.log(neg_weights),
        shape=(batch_size, context_size * n_negs))

    # One fused gather for positives + negatives: (B, CT, E).
    words = jnp.concatenate([owords, nwords.astype(owords.dtype)], axis=1)
    cat = jnp.take(emb_o, words, axis=0)          # (B, CT, E), native dtype
    iv = jnp.take(emb_i, iword, axis=0)           # (B, E),     native dtype

    itemsize = jnp.dtype(cat.dtype).itemsize
    tb = _pick_batch_tile(batch_size, ct, embed_dim, itemsize)
    grid = (batch_size // tb,)

    kernel = functools.partial(sgns_loss_kernel, context_size=context_size)
    per_sample = pl.pallas_call(
        kernel,
        out_shape=jax.ShapeDtypeStruct((batch_size, 1), jnp.float32),
        grid_spec=pltpu.PrefetchScalarGridSpec(
            num_scalar_prefetch=0,
            grid=grid,
            in_specs=[
                pl.BlockSpec((tb, embed_dim), lambda b: (b, 0)),
                pl.BlockSpec((tb, ct, embed_dim), lambda b: (b, 0, 0)),
            ],
            out_specs=pl.BlockSpec((tb, 1), lambda b: (b, 0)),
        ),
        compiler_params=pltpu.CompilerParams(
            dimension_semantics=("parallel",),
            vmem_limit_bytes=32 * 1024 * 1024,
        ),
        cost_estimate=pl.CostEstimate(
            flops=2 * batch_size * ct * embed_dim,
            transcendentals=2 * batch_size * ct,
            bytes_accessed=(batch_size * ct * embed_dim
                            + batch_size * embed_dim) * int(itemsize)
                           + batch_size * 4,
        ),
    )(iv, cat)

    # Finish the mean over the TRUE batch size in glue (kernel is tiled).
    return jnp.mean(per_sample)


if __name__ == "__main__":
    # Small synthetic configuration.
    vocab_size = 200
    embed_dim = 32
    batch_size = 2
    context_size = 8
    n_negs = 20

    key = jax.random.PRNGKey(0)
    k_emb_i, k_emb_o, k_iw, k_ow, k_neg = jax.random.split(key, 5)

    # Deterministic parameter init (word2vec-style uniform).
    bound = 0.5 / embed_dim
    emb_i = jax.random.uniform(
        k_emb_i, (vocab_size, embed_dim), jnp.float32, -bound, bound)
    emb_o = jax.random.uniform(
        k_emb_o, (vocab_size, embed_dim), jnp.float32, -bound, bound)

    # Unigram counts -> weights ** 0.75, normalized (matches __init__).
    counts = jnp.arange(1, vocab_size + 1, dtype=jnp.float32)
    wf = counts ** 0.75
    neg_weights = wf / wf.sum()

    iword = jax.random.randint(k_iw, (batch_size,), 0, vocab_size)
    owords = jax.random.randint(k_ow, (batch_size, context_size), 0, vocab_size)

    loss = sgns_forward(iword, owords, emb_i, emb_o, neg_weights, n_negs, k_neg)
    jax.block_until_ready(loss)

    # Pure-JAX reference of the forward math (same nwords) for sanity.
    nwords = jax.random.categorical(
        k_neg, jnp.log(neg_weights),
        shape=(batch_size, context_size * n_negs))
    iv = emb_i[iword]
    ov = emb_o[owords]
    nv = emb_o[nwords]
    o_s = jnp.einsum("bce,be->bc", ov, iv)
    n_s = -jnp.einsum("bce,be->bc", nv, iv)
    ol = jax.nn.log_sigmoid(o_s).mean(1)
    nl = jax.nn.log_sigmoid(n_s).reshape(
        batch_size, context_size, n_negs).sum(2).mean(1)
    ref = -(ol + nl).mean()
    # MXU matmul in the kernel vs XLA einsum in the reference -> allow small
    # precision drift.
    assert jnp.allclose(loss, ref, rtol=1e-3, atol=1e-3), (loss, ref)

    print("KERNEL_OK")
</pallas_src>

<mosaic_0001>
module attributes {stable_mosaic.version = 11 : i64} {
  func.func @sgns_loss_kernel(%arg0: i32, %arg1: memref<2x32xf32, #tpu.memory_space<vmem>>, %arg2: memref<2x168x32xf32, #tpu.memory_space<vmem>>, %arg3: memref<2x1xf32, #tpu.memory_space<vmem>>) attributes {dimension_semantics = [#tpu.dimension_semantics<parallel>], iteration_bounds = array<i64: 1>, scalar_prefetch = 0 : i64, scratch_operands = 0 : i64, tpu.core_type = #tpu.core_type<tc>, window_params = [{transform_indices = @transform_0, window_bounds = array<i64: 2, 32>}, {transform_indices = @transform_1, window_bounds = array<i64: 2, 168, 32>}, {transform_indices = @transform_2, window_bounds = array<i64: 2, 1>}]} {
    %c0 = arith.constant 0 : index
    %c0_0 = arith.constant 0 : index
    %0 = vector.load %arg1[%c0, %c0_0] : memref<2x32xf32, #tpu.memory_space<vmem>>, vector<2x32xf32>
    %c0_1 = arith.constant 0 : index
    %c0_2 = arith.constant 0 : index
    %c0_3 = arith.constant 0 : index
    %1 = vector.load %arg2[%c0_1, %c0_2, %c0_3] : memref<2x168x32xf32, #tpu.memory_space<vmem>>, vector<2x168x32xf32>
    %2 = vector.shape_cast %0 : vector<2x32xf32> to vector<2x1x32xf32>
    "tpu.trace_start"() <{level = 10 : i32, message = "bqe,bce->bqc"}> : () -> ()
    %cst = arith.constant dense<0.000000e+00> : vector<2x1x168xf32>
    %3 = tpu.matmul %2, %1, %cst {dimension_numbers = #tpu.dot_dimension_numbers<[2], [2], [1], [1], [0, 0, 0, 1, 1, 1], [0], [0]>} : vector<2x1x32xf32>, vector<2x168x32xf32>, vector<2x1x168xf32> -> vector<2x1x168xf32>
    "tpu.trace_stop"() : () -> ()
    %4 = vector.shape_cast %3 : vector<2x1x168xf32> to vector<2x168xf32>
    %5 = tpu.iota {dimensions = array<i32: 1>} : vector<2x168xi32>
    %c8_i32 = arith.constant 8 : i32
    %6 = vector.broadcast %c8_i32 : i32 to vector<2x168xi32>
    %7 = arith.cmpi slt, %5, %6 : vector<2x168xi32>
    %cst_4 = arith.constant 0.000000e+00 : f32
    %8 = vector.broadcast %cst_4 : f32 to vector<2x168xf32>
    %9 = arith.subf %8, %4 : vector<2x168xf32>
    %10 = arith.select %7, %4, %9 : vector<2x168xi1>, vector<2x168xf32>
    %cst_5 = arith.constant 0.000000e+00 : f32
    %11 = vector.broadcast %cst_5 : f32 to vector<2x168xf32>
    %12 = arith.minimumf %10, %11 : vector<2x168xf32>
    %13 = math.absf %10 : vector<2x168xf32>
    %cst_6 = arith.constant 0.000000e+00 : f32
    %14 = vector.broadcast %cst_6 : f32 to vector<2x168xf32>
    %15 = arith.subf %14, %13 : vector<2x168xf32>
    %16 = math.exp %15 : vector<2x168xf32>
    %cst_7 = arith.constant 1.000000e+00 : f32
    %17 = vector.broadcast %cst_7 : f32 to vector<2x168xf32>
    %18 = arith.addf %17, %16 : vector<2x168xf32>
    %19 = math.log %18 : vector<2x168xf32>
    %20 = arith.subf %12, %19 : vector<2x168xf32>
    %cst_8 = arith.constant dense<0.000000e+00> : vector<2xf32>
    %21 = vector.multi_reduction <add>, %20, %cst_8 [1] : vector<2x168xf32> to vector<2xf32>
    %22 = vector.shape_cast %21 : vector<2xf32> to vector<2x1xf32>
    %cst_9 = arith.constant 8.000000e+00 : f32
    %23 = vector.broadcast %cst_9 : f32 to vector<2x1xf32>
    %24 = arith.divf %22, %23 : vector<2x1xf32>
    %cst_10 = arith.constant 0.000000e+00 : f32
    %25 = vector.broadcast %cst_10 : f32 to vector<2x1xf32>
    %26 = arith.subf %25, %24 : vector<2x1xf32>
    %c0_11 = arith.constant 0 : index
    %c0_12 = arith.constant 0 : index
    %27 = vector.load %arg3[%c0_11, %c0_12] : memref<2x1xf32, #tpu.memory_space<vmem>>, vector<2x1xf32>
    tpu.vector_store %arg3[%c0_11, %c0_12], %26 {strides = array<i32>} : memref<2x1xf32, #tpu.memory_space<vmem>>, vector<2x1xf32>,
    return
  }
  func.func @transform_0(%arg0: i32) -> (i32, i32) {
    %c0_i32 = arith.constant 0 : i32
    %c0_i32_0 = arith.constant 0 : i32
    return %arg0, %c0_i32 : i32, i32
  }
  func.func @transform_1(%arg0: i32) -> (i32, i32, i32) {
    %c0_i32 = arith.constant 0 : i32
    %c0_i32_0 = arith.constant 0 : i32
    %c0_i32_1 = arith.constant 0 : i32
    return %arg0, %c0_i32, %c0_i32_0 : i32, i32, i32
  }
  func.func @transform_2(%arg0: i32) -> (i32, i32) {
    %c0_i32 = arith.constant 0 : i32
    %c0_i32_0 = arith.constant 0 : i32
    return %arg0, %c0_i32 : i32, i32
  }
}

</mosaic_0001>

<llo_original>
// kernel: tpu_custom_call.1
$region0: #{tpu_custom_call.1}
  #allocation0 [shape = 'u32[]', space=smem, size = 0x4, offset = 0x4, fixed_abs, tag = 'smem constant byte address 0x4 - core index']
  #allocation1 [shape = 'u32[144,128]{1,0:T(1,128)}', space=vmem, size = 0x12000, scoped, tag = 'internal scratch']
  %s0 = inlined_call_operand.vmem [shape: f32[2,32], index: 0, kind: input, shape index: {}]
  %s1 = inlined_call_operand.vmem [shape: f32[2,168,32], index: 1, kind: input, shape index: {}]
  %s2 = inlined_call_operand.vmem [shape: f32[2,1], index: 2, kind: output, shape index: {}]
  %s3 = sld [smem:[#allocation0]]
  $region18: #{tpu_custom_call.1} parent=0
    _
  %s5 = ssub.s32 1, %s3
  %s6 = scalar_select 0, %s5, %s3
  // Predicated region
  $region2: #{tpu_custom_call.1} parent=0 // pred_check
    _
  $region3: #{tpu_custom_call.1} parent=0 // pred_check_branch
    %8 = sbr.rel (0) target = $region5
  $region4: #{tpu_custom_call.1} parent=0 // pred_region
    _
  $region5: #{tpu_custom_call.1} parent=0 // pred_fallthru
    _
  // Predicated region
  $region6: #{tpu_custom_call.1} parent=0 // pred_check
    _
  $region7: #{tpu_custom_call.1} parent=0 // pred_check_branch
    %10 = sbr.rel (0) target = $region9
  $region8: #{tpu_custom_call.1} parent=0 // pred_region
    _
  $region9: #{tpu_custom_call.1} parent=0 // pred_fallthru
    _
  %v11 = vld [vmem:[%s0] sm:$0x3]
  %v12 = vld [vmem:[%s1] sm:$0xff]
  %v13 = vld [vmem:[%s1 + $0x8] sm:$0xff]
  %v14 = vld [vmem:[%s1 + $0x10] sm:$0xff]
  %v15 = vld [vmem:[%s1 + $0x18] sm:$0xff]
  %v16 = vld [vmem:[%s1 + $0x20] sm:$0xff]
  %v17 = vld [vmem:[%s1 + $0x28] sm:$0xff]
  %v18 = vld [vmem:[%s1 + $0x30] sm:$0xff]
  %v19 = vld [vmem:[%s1 + $0x38] sm:$0xff]
  %v20 = vld [vmem:[%s1 + $0x40] sm:$0xff]
  %v21 = vld [vmem:[%s1 + $0x48] sm:$0xff]
  %v22 = vld [vmem:[%s1 + $0x50] sm:$0xff]
  %v23 = vld [vmem:[%s1 + $0x58] sm:$0xff]
  %v24 = vld [vmem:[%s1 + $0x60] sm:$0xff]
  %v25 = vld [vmem:[%s1 + $0x68] sm:$0xff]
  %v26 = vld [vmem:[%s1 + $0x70] sm:$0xff]
  %v27 = vld [vmem:[%s1 + $0x78] sm:$0xff]
  %v28 = vld [vmem:[%s1 + $0x80] sm:$0xff]
  %v29 = vld [vmem:[%s1 + $0x88] sm:$0xff]
  %v30 = vld [vmem:[%s1 + $0x90] sm:$0xff]
  %v31 = vld [vmem:[%s1 + $0x98] sm:$0xff]
  %v32 = vld [vmem:[%s1 + $0xa0] sm:$0xff]
  %v33 = vld [vmem:[%s1 + $0xa8] sm:$0xff]
  %v34 = vld [vmem:[%s1 + $0xb0] sm:$0xff]
  %v35 = vld [vmem:[%s1 + $0xb8] sm:$0xff]
  %v36 = vld [vmem:[%s1 + $0xc0] sm:$0xff]
  %v37 = vld [vmem:[%s1 + $0xc8] sm:$0xff]
  %v38 = vld [vmem:[%s1 + $0xd0] sm:$0xff]
  %v39 = vld [vmem:[%s1 + $0xd8] sm:$0xff]
  %v40 = vld [vmem:[%s1 + $0xe0] sm:$0xff]
  %v41 = vld [vmem:[%s1 + $0xe8] sm:$0xff]
  %v42 = vld [vmem:[%s1 + $0xf0] sm:$0xff]
  %v43 = vld [vmem:[%s1 + $0xf8] sm:$0xff]
  %v44 = vld [vmem:[%s1 + $0x100] sm:$0xff]
  %v45 = vld [vmem:[%s1 + $0x108] sm:$0xff]
  %v46 = vld [vmem:[%s1 + $0x110] sm:$0xff]
  %v47 = vld [vmem:[%s1 + $0x118] sm:$0xff]
  %v48 = vld [vmem:[%s1 + $0x120] sm:$0xff]
  %v49 = vld [vmem:[%s1 + $0x128] sm:$0xff]
  %v50 = vld [vmem:[%s1 + $0x130] sm:$0xff]
  %v51 = vld [vmem:[%s1 + $0x138] sm:$0xff]
  %v52 = vld [vmem:[%s1 + $0x140] sm:$0xff]
  %v53 = vld [vmem:[%s1 + $0x148] sm:$0xff]
  %v56 = vunpack.c.l.s4 1966171168
  %v57 = vunpack.c.0.s8 %v56
  %v58 = vlaneseq
  %v59 = vshrl.u32 %v58, 7
  %v60 = vsub.s32 %v57, %v59
  %v61 = vrot.slane %v11, %v60
  %v62 = vcombine.high %v61, %v61
  %v64 = vunpack.c.l.s4 1966171168
  %v65 = vunpack.c.0.s8 %v64
  %v66 = vlaneseq
  %v67 = vshrl.u32 %v66, 7
  %v68 = vsub.s32 %v65, %v67
  %v69 = vrot.slane %v61, %v68
  %v71 = vunpack.c.l.s4 1966171168
  %v72 = vunpack.c.0.s8 %v71
  %v73 = vlaneseq
  %v74 = vshrl.u32 %v73, 7
  %v75 = vsub.s32 %v72, %v74
  %v76 = vrot.slane %v62, %v75
  %vm77 = vcmask 261120
  %v78 = vsel %vm77, %v69, 0
  %v81 = vsel %vm77, %v12, 0
  %v84 = vsel %vm77, %v13, 0
  %v87 = vsel %vm77, %v14, 0
  %v90 = vsel %vm77, %v15, 0
  %v93 = vsel %vm77, %v16, 0
  %v96 = vsel %vm77, %v17, 0
  %v99 = vsel %vm77, %v18, 0
  %v102 = vsel %vm77, %v19, 0
  %v105 = vsel %vm77, %v20, 0
  %v108 = vsel %vm77, %v21, 0
  %v111 = vsel %vm77, %v22, 0
  %v114 = vsel %vm77, %v23, 0
  %v117 = vsel %vm77, %v24, 0
  %v120 = vsel %vm77, %v25, 0
  %v123 = vsel %vm77, %v26, 0
  %v126 = vsel %vm77, %v27, 0
  %v129 = vsel %vm77, %v28, 0
  %v132 = vsel %vm77, %v29, 0
  %v135 = vsel %vm77, %v30, 0
  %v138 = vsel %vm77, %v31, 0
  %v141 = vsel %vm77, %v32, 0
  %143 = vmatprep.subr.mxu0 0.0
  %144 = vmatpush1.xpose.msra.mxu0 %v81
  %145 = vmatprep.subr.mxu0 0.0
  %146 = vmatpush1.xpose.msra.mxu0 %v84
  %147 = vmatprep.subr.mxu0 0.0
  %148 = vmatpush1.xpose.msra.mxu0 %v87
  %149 = vmatprep.subr.mxu0 0.0
  %150 = vmatpush1.xpose.msra.mxu0 %v90
  %151 = vmatprep.subr.mxu0 0.0
  %152 = vmatpush1.xpose.msra.mxu0 %v93
  %153 = vmatprep.subr.mxu0 0.0
  %154 = vmatpush1.xpose.msra.mxu0 %v96
  %155 = vmatprep.subr.mxu0 0.0
  %156 = vmatpush1.xpose.msra.mxu0 %v99
  %157 = vmatprep.subr.mxu0 0.0
  %158 = vmatpush1.xpose.msra.mxu0 %v102
  %159 = vmatprep.subr.mxu0 0.0
  %160 = vmatpush1.xpose.msra.mxu0 %v105
  %161 = vmatprep.subr.mxu0 0.0
  %162 = vmatpush1.xpose.msra.mxu0 %v108
  %163 = vmatprep.subr.mxu0 0.0
  %164 = vmatpush1.xpose.msra.mxu0 %v111
  %165 = vmatprep.subr.mxu0 0.0
  %166 = vmatpush1.xpose.msra.mxu0 %v114
  %167 = vmatprep.subr.mxu0 0.0
  %168 = vmatpush1.xpose.msra.mxu0 %v117
  %169 = vmatprep.subr.mxu0 0.0
  %170 = vmatpush1.xpose.msra.mxu0 %v120
  %171 = vmatprep.subr.mxu0 0.0
  %172 = vmatpush1.xpose.msra.mxu0 %v123
  %173 = vmatprep.subr.mxu0 0.0
  %174 = vmatpush1.xpose.msra.mxu0 %v126
  %175 = vmatprep.subr.mxu0 0.0
  %176 = vmatpush1.xpose.msra.mxu0 %v129
  %177 = vmatprep.subr.mxu0 0.0
  %178 = vmatpush1.xpose.msra.mxu0 %v132
  %179 = vmatprep.subr.mxu0 0.0
  %180 = vmatpush1.xpose.msra.mxu0 %v135
  %181 = vmatprep.subr.mxu0 0.0
  %182 = vmatpush1.xpose.msra.mxu0 %v138
  %183 = vmatprep.subr.mxu0 0.0
  %184 = vmatpush1.xpose.msra.mxu0 %v141
  %185 = vmatprep.subr.mxu0 0.0
  %186 = vmatpush1.xpose.msra.mxu0 0.0
  %187 = vmatprep.subr.mxu0 0.0
  %188 = vmatpush1.xpose.msra.mxu0 0.0
  %189 = vmatprep.subr.mxu0 0.0
  %190 = vmatpush1.xpose.msra.mxu0 0.0
  %191 = vmatprep.subr.mxu0 0.0
  %192 = vmatpush1.xpose.msra.mxu0 0.0
  %193 = vmatprep.subr.mxu0 0.0
  %194 = vmatpush1.xpose.msra.mxu0 0.0
  %195 = vmatprep.subr.mxu0 0.0
  %196 = vmatpush1.xpose.msra.mxu0 0.0
  %197 = vmatprep.subr.mxu0 0.0
  %198 = vmatpush1.xpose.msra.mxu0 0.0
  %199 = vmatprep.subr.mxu0 0.0
  %200 = vmatpush1.xpose.msra.mxu0 0.0
  %201 = vmatprep.subr.mxu0 0.0
  %202 = vmatpush1.xpose.msra.mxu0 0.0
  %203 = vmatprep.subr.mxu0 0.0
  %204 = vmatpush1.xpose.msra.mxu0 0.0
  %205 = vmatprep.subr.mxu0 0.0
  %206 = vmatpush1.xpose.msra.mxu0 0.0
  %207 = vmatprep.mubr.f32.mxu0 0.0
  %208 = vmatmul.mubr.f32.gmra.mrb[0].mxu0 %v78
  %v209 = vpop.f32.mrb[0].mxu0
  %v210 = vadd.f32 0.0, %v209
  %v211 = vpop.f32.mrb[0].mxu0
  %v212 = vadd.f32 0.0, %v211
  %213 = vdwg.mxu0
  %v214 = vsel %vm77, %v76, 0
  %v217 = vsel %vm77, %v33, 0
  %v220 = vsel %vm77, %v34, 0
  %v223 = vsel %vm77, %v35, 0
  %v226 = vsel %vm77, %v36, 0
  %v229 = vsel %vm77, %v37, 0
  %v232 = vsel %vm77, %v38, 0
  %v235 = vsel %vm77, %v39, 0
  %v238 = vsel %vm77, %v40, 0
  %v241 = vsel %vm77, %v41, 0
  %v244 = vsel %vm77, %v42, 0
  %v247 = vsel %vm77, %v43, 0
  %v250 = vsel %vm77, %v44, 0
  %v253 = vsel %vm77, %v45, 0
  %v256 = vsel %vm77, %v46, 0
  %v259 = vsel %vm77, %v47, 0
  %v262 = vsel %vm77, %v48, 0
  %v265 = vsel %vm77, %v49, 0
  %v268 = vsel %vm77, %v50, 0
  %v271 = vsel %vm77, %v51, 0
  %v274 = vsel %vm77, %v52, 0
  %v277 = vsel %vm77, %v53, 0
  %279 = vmatprep.subr.mxu0 0.0
  %280 = vmatpush1.xpose.msra.mxu0 %v217
  %281 = vmatprep.subr.mxu0 0.0
  %282 = vmatpush1.xpose.msra.mxu0 %v220
  %283 = vmatprep.subr.mxu0 0.0
  %284 = vmatpush1.xpose.msra.mxu0 %v223
  %285 = vmatprep.subr.mxu0 0.0
  %286 = vmatpush1.xpose.msra.mxu0 %v226
  %287 = vmatprep.subr.mxu0 0.0
  %288 = vmatpush1.xpose.msra.mxu0 %v229
  %289 = vmatprep.subr.mxu0 0.0
  %290 = vmatpush1.xpose.msra.mxu0 %v232
  %291 = vmatprep.subr.mxu0 0.0
  %292 = vmatpush1.xpose.msra.mxu0 %v235
  %293 = vmatprep.subr.mxu0 0.0
  %294 = vmatpush1.xpose.msra.mxu0 %v238
  %295 = vmatprep.subr.mxu0 0.0
  %296 = vmatpush1.xpose.msra.mxu0 %v241
  %297 = vmatprep.subr.mxu0 0.0
  %298 = vmatpush1.xpose.msra.mxu0 %v244
  %299 = vmatprep.subr.mxu0 0.0
  %300 = vmatpush1.xpose.msra.mxu0 %v247
  %301 = vmatprep.subr.mxu0 0.0
  %302 = vmatpush1.xpose.msra.mxu0 %v250
  %303 = vmatprep.subr.mxu0 0.0
  %304 = vmatpush1.xpose.msra.mxu0 %v253
  %305 = vmatprep.subr.mxu0 0.0
  %306 = vmatpush1.xpose.msra.mxu0 %v256
  %307 = vmatprep.subr.mxu0 0.0
  %308 = vmatpush1.xpose.msra.mxu0 %v259
  %309 = vmatprep.subr.mxu0 0.0
  %310 = vmatpush1.xpose.msra.mxu0 %v262
  %311 = vmatprep.subr.mxu0 0.0
  %312 = vmatpush1.xpose.msra.mxu0 %v265
  %313 = vmatprep.subr.mxu0 0.0
  %314 = vmatpush1.xpose.msra.mxu0 %v268
  %315 = vmatprep.subr.mxu0 0.0
  %316 = vmatpush1.xpose.msra.mxu0 %v271
  %317 = vmatprep.subr.mxu0 0.0
  %318 = vmatpush1.xpose.msra.mxu0 %v274
  %319 = vmatprep.subr.mxu0 0.0
  %320 = vmatpush1.xpose.msra.mxu0 %v277
  %321 = vmatprep.subr.mxu0 0.0
  %322 = vmatpush1.xpose.msra.mxu0 0.0
  %323 = vmatprep.subr.mxu0 0.0
  %324 = vmatpush1.xpose.msra.mxu0 0.0
  %325 = vmatprep.subr.mxu0 0.0
  %326 = vmatpush1.xpose.msra.mxu0 0.0
  %327 = vmatprep.subr.mxu0 0.0
  %328 = vmatpush1.xpose.msra.mxu0 0.0
  %329 = vmatprep.subr.mxu0 0.0
  %330 = vmatpush1.xpose.msra.mxu0 0.0
  %331 = vmatprep.subr.mxu0 0.0
  %332 = vmatpush1.xpose.msra.mxu0 0.0
  %333 = vmatprep.subr.mxu0 0.0
  %334 = vmatpush1.xpose.msra.mxu0 0.0
  %335 = vmatprep.subr.mxu0 0.0
  %336 = vmatpush1.xpose.msra.mxu0 0.0
  %337 = vmatprep.subr.mxu0 0.0
  %338 = vmatpush1.xpose.msra.mxu0 0.0
  %339 = vmatprep.subr.mxu0 0.0
  %340 = vmatpush1.xpose.msra.mxu0 0.0
  %341 = vmatprep.subr.mxu0 0.0
  %342 = vmatpush1.xpose.msra.mxu0 0.0
  %343 = vmatprep.mubr.f32.mxu0 0.0
  %344 = vmatmul.mubr.f32.gmra.mrb[0].mxu0 %v214
  %v345 = vpop.f32.mrb[0].mxu0
  %v346 = vadd.f32 0.0, %v345
  %v347 = vpop.f32.mrb[0].mxu0
  %v348 = vadd.f32 0.0, %v347
  %349 = vdwg.mxu0
  %v350 = vlaneseq
  %v351 = vand.u32 %v350, 127
  %v352 = vadd.s32 %v351, 128
  %vm353 = vcmp.lt.s32.totalorder %v351, 8
  %vm354 = vcmp.lt.s32.totalorder %v352, 8
  %v355 = vsub.f32 0.0, %v210
  %v356 = vsub.f32 0.0, %v212
  %v357 = vsub.f32 0.0, %v346
  %v358 = vsub.f32 0.0, %v348
  %v363 = vrot.slane %v346, 7
  %vm364 = vcmask 1041409
  %v365 = vsel %vm364, %v363, %v210
  %v366 = vrot.slane %v348, 7
  %v367 = vsel %vm364, %v366, %v212
  %v374 = vrot.slane %v357, 7
  %v375 = vsel %vm364, %v374, %v355
  %v376 = vrot.slane %v358, 7
  %v377 = vsel %vm364, %v376, %v356
  %v380 = vsel %vm353, %v365, %v375
  %v381 = vsel %vm354, %v367, %v377
  %v382 = vmin.f32 %v380, 0.0
  %v383 = vmin.f32 %v381, 0.0
  %v384 = vand.u32 2147483647, %v380
  %v385 = vand.u32 2147483647, %v381
  %v386 = vsub.f32 0.0, %v384
  %v387 = vsub.f32 0.0, %v385
  %v388 = vmul.f32 %v386, 1.442695
  %v389 = vpow.pop %v388
  %v390 = vmul.f32 %v387, 1.442695
  %v391 = vpow.pop %v390
  %v392 = vadd.f32 %v389, 1.0
  %v393 = vadd.f32 %v391, 1.0
  %v394 = vlog2.pop %v392
  %v395 = vmul.f32 %v394, 0.6931472
  %v396 = vlog2.pop %v393
  %v397 = vmul.f32 %v396, 0.6931472
  %v398 = vsub.f32 %v382, %v395
  %v399 = vsub.f32 %v383, %v397
  %vm400 = vcmask 1041408
  %v401 = vsel %vm400, %v398, 0.0
  %vm402 = vcmask 320512
  %v403 = vsel %vm402, %v399, 0.0
  %v404 = vadd.f32 %v401, %v403
  %405 = vadd.xlane.f32.xlu0 %v404
  %v406 = vpop.xlane.xlu0 %405
  %v407 = vrcp.pop 8.0
  %v408 = vmul.f32 %v406, %v407
  %v409 = vsub.f32 0.0, %v408
  %vm410 = vcmask 1024
  %411 = vst.msk [vmem:[%s2] sm:$0x3] %vm410, %v409
  // Predicated region
  $region10: #{tpu_custom_call.1} parent=0 // pred_check
    _
  $region11: #{tpu_custom_call.1} parent=0 // pred_check_branch
    %413 = sbr.rel (0) target = $region13
  $region12: #{tpu_custom_call.1} parent=0 // pred_region
    _
  $region13: #{tpu_custom_call.1} parent=0 // pred_fallthru
    _
  // Predicated region
  $region14: #{tpu_custom_call.1} parent=0 // pred_check
    _
  $region15: #{tpu_custom_call.1} parent=0 // pred_check_branch
    %415 = sbr.rel (0) target = $region17
  $region16: #{tpu_custom_call.1} parent=0 // pred_region
    _
  $region17: #{tpu_custom_call.1} parent=0 // pred_fallthru
    _

</llo_original>
